<compile_context>
chip_gen: v6e
topology: v6e:2x2x1
jax: 0.10.0
libtpu: 0.0.40
codegen_flags: <defaults>
</compile_context>

<pallas_src>
import math

import jax
import jax.numpy as jnp
from jax.experimental import pallas as pl
from jax.experimental.pallas import tpu as pltpu

# HBM->HBM DMA chunk size for the ragged path (elements). 4M f32 elems = 16 MiB
# per DMA descriptor: a handful of large descriptors streams at full DMA rate.
_DMA_CHUNK_ELEMS = 4 * 1024 * 1024


def _chip_tiling():
    """(target_block_bytes, vmem_limit_bytes) for the VMEM-staged copy.

    v6e / v7x: 8 MiB blocks -> 4x8 = 32 MiB live with double buffering, inside
    a 48 MiB scoped limit (fits v7x's 64 MiB physical VMEM, trivial on v6e).
    v5-class: 4 MiB blocks -> 16 MiB live, 32 MiB scoped limit.
    """
    try:
        kind = jax.devices()[0].device_kind.lower()
    except Exception:  # pragma: no cover - backend not initialised yet
        kind = ""
    if "v5" in kind:
        return 4 * 1024 * 1024, 32 * 1024 * 1024
    return 8 * 1024 * 1024, 48 * 1024 * 1024


def _copy_kernel(x_ref, o_ref):
    # Identity copy of the current tile (lane-dense, unmasked vld/vst).
    o_ref[...] = x_ref[...]


def _pallas_copy_2d(x2d: jax.Array) -> jax.Array:
    """Tiled VMEM-staged copy of a 2D (rows, lanes) array, lanes % 128 == 0."""
    R, C = x2d.shape
    itemsize = max(1, x2d.dtype.itemsize)
    block_bytes, vmem_limit = _chip_tiling()

    # Dtype-native sublane multiple: 8 for 4-byte, 16 for 2-byte, 32 for 1-byte
    # dtypes, so packed-row (sub-32-bit) tiles never hit the packed-edge path.
    sublane = max(8, 32 // itemsize)

    # Largest row-tile (multiple of `sublane`) near the per-chip block target.
    max_tr = max(sublane, (block_bytes // (C * itemsize)) // sublane * sublane)
    tr = R if R <= max_tr else max_tr  # full extent is always a legal block dim
    grid = (pl.cdiv(R, tr),)

    return pl.pallas_call(
        _copy_kernel,
        out_shape=jax.ShapeDtypeStruct((R, C), x2d.dtype),
        grid_spec=pltpu.PrefetchScalarGridSpec(
            num_scalar_prefetch=0,
            grid=grid,
            in_specs=[pl.BlockSpec((tr, C), lambda i: (i, 0))],
            out_specs=pl.BlockSpec((tr, C), lambda i: (i, 0)),
        ),
        compiler_params=pltpu.CompilerParams(
            # Shards the row axis across v7x's two TensorCores; no-op on
            # single-TC v5e / v6e.
            dimension_semantics=("parallel",),
            vmem_limit_bytes=vmem_limit,
        ),
        # Pure memory-bound op: tell XLA's scheduler how much HBM it touches.
        cost_estimate=pl.CostEstimate(
            flops=0, transcendentals=0, bytes_accessed=2 * R * C * itemsize
        ),
    )(x2d)


def _pallas_copy_1d_dma(x1d: jax.Array) -> jax.Array:
    """Single-pass HBM->HBM copy of a flat stream of arbitrary length.

    No VMEM staging, no padding, no post-slice: a few large DMA descriptors
    move the bytes directly (one pass over HBM instead of 2-3 for pad+slice).
    """
    n = x1d.shape[0]
    itemsize = max(1, x1d.dtype.itemsize)
    chunk = min(n, _DMA_CHUNK_ELEMS)
    num_full = n // chunk
    rem = n - num_full * chunk
    num_dmas = num_full + (1 if rem else 0)

    def kernel(x_hbm, o_hbm, sems):
        copies = []
        for c in range(num_full):
            off = c * chunk
            cp = pltpu.make_async_copy(
                x_hbm.at[pl.ds(off, chunk)],
                o_hbm.at[pl.ds(off, chunk)],
                sems.at[c],
            )
            cp.start()
            copies.append(cp)
        if rem:
            off = num_full * chunk
            cp = pltpu.make_async_copy(
                x_hbm.at[pl.ds(off, rem)],
                o_hbm.at[pl.ds(off, rem)],
                sems.at[num_full],
            )
            cp.start()
            copies.append(cp)
        for cp in copies:
            cp.wait()

    return pl.pallas_call(
        kernel,
        out_shape=jax.ShapeDtypeStruct((n,), x1d.dtype),
        in_specs=[pl.BlockSpec(memory_space=pl.ANY)],
        out_specs=pl.BlockSpec(memory_space=pl.ANY),
        scratch_shapes=[pltpu.SemaphoreType.DMA((num_dmas,))],
        cost_estimate=pl.CostEstimate(
            flops=0, transcendentals=0, bytes_accessed=2 * n * itemsize
        ),
    )(x1d)


def flatten(x: jax.Array, start_dim: int = 1, end_dim: int = -1,
            *, use_pallas_copy: bool = False) -> jax.Array:
    """Equivalent of the PyTorch Flatten module's forward.

    Default path: contiguous row-major flatten is a metadata-only reshape
    (zero HBM traffic).  `use_pallas_copy=True` routes the element stream
    through the Pallas copy kernels (exercise / debug path).
    """
    shape = x.shape
    ndim = len(shape)
    start = start_dim if start_dim >= 0 else ndim + start_dim
    end = end_dim if end_dim >= 0 else ndim + end_dim
    shape_left = shape[:start]
    shape_right = shape[end + 1:]
    shape_middle = int(math.prod(shape[start:end + 1]))
    out_shape = tuple(shape_left) + (shape_middle,) + tuple(shape_right)

    if not use_pallas_copy:
        # Performance-correct Flatten: no kernel, no HBM traffic.
        return jnp.reshape(x, out_shape)

    n = int(math.prod(shape))
    if n == 0:
        return jnp.reshape(x, out_shape)

    # Contiguous flatten lets us pick any 2D factorization of the flat stream:
    # choose the widest lane count (multiple of 128, capped at 1024) dividing n
    # so every store is lane-dense and unmasked.
    lane = next((c for c in (1024, 512, 256, 128) if n % c == 0), None)
    if lane is not None:
        y2d = _pallas_copy_2d(jnp.reshape(x, (n // lane, lane)))
        return jnp.reshape(y2d, out_shape)

    # Ragged total (n not a multiple of 128): one-pass HBM->HBM DMA copy.
    y1d = _pallas_copy_1d_dma(jnp.reshape(x, (n,)))
    return jnp.reshape(y1d, out_shape)


if __name__ == "__main__":
    key = jax.random.PRNGKey(0)
    # Small NCHW input consistent with typical CNN usage of Flatten.
    x = jax.random.normal(key, (2, 4, 16, 16), dtype=jnp.float32)
    y_ref = jnp.reshape(x, (2, 4 * 16 * 16))

    # 1) Default (recommended) path: metadata-only reshape.
    y = jax.block_until_ready(flatten(x, start_dim=1, end_dim=-1))
    assert y.shape == (2, 1024) and y.dtype == x.dtype
    assert bool(jnp.array_equal(y, y_ref))

    # 2) Exercise path, aligned total: lane-dense tiled VMEM copy kernel.
    y_k = jax.block_until_ready(flatten(x, use_pallas_copy=True))
    assert y_k.shape == (2, 1024) and y_k.dtype == x.dtype
    assert bool(jnp.array_equal(y_k, y_ref))

    # 3) Exercise path, ragged total (n % 128 != 0): HBM->HBM DMA copy kernel.
    xr = jax.random.normal(jax.random.PRNGKey(1), (2, 3, 5, 7), dtype=jnp.float32)
    yr = jax.block_until_ready(flatten(xr, use_pallas_copy=True))
    assert yr.shape == (2, 3 * 5 * 7) and yr.dtype == xr.dtype
    assert bool(jnp.array_equal(yr, jnp.reshape(xr, (2, 105))))

    print("KERNEL_OK")
</pallas_src>

<mosaic_0001>
module attributes {stable_mosaic.version = 11 : i64} {
  func.func @_copy_kernel(%arg0: i32, %arg1: memref<2x1024xf32, #tpu.memory_space<vmem>>, %arg2: memref<2x1024xf32, #tpu.memory_space<vmem>>) attributes {dimension_semantics = [#tpu.dimension_semantics<parallel>], iteration_bounds = array<i64: 1>, scalar_prefetch = 0 : i64, scratch_operands = 0 : i64, tpu.core_type = #tpu.core_type<tc>, window_params = [{transform_indices = @transform_0, window_bounds = array<i64: 2, 1024>}, {transform_indices = @transform_1, window_bounds = array<i64: 2, 1024>}]} {
    %c0 = arith.constant 0 : index
    %c0_0 = arith.constant 0 : index
    %0 = vector.load %arg1[%c0, %c0_0] : memref<2x1024xf32, #tpu.memory_space<vmem>>, vector<2x1024xf32>
    %c0_1 = arith.constant 0 : index
    %c0_2 = arith.constant 0 : index
    %1 = vector.load %arg2[%c0_1, %c0_2] : memref<2x1024xf32, #tpu.memory_space<vmem>>, vector<2x1024xf32>
    tpu.vector_store %arg2[%c0_1, %c0_2], %0 {strides = array<i32>} : memref<2x1024xf32, #tpu.memory_space<vmem>>, vector<2x1024xf32>,
    return
  }
  func.func @transform_0(%arg0: i32) -> (i32, i32) {
    %c0_i32 = arith.constant 0 : i32
    %c0_i32_0 = arith.constant 0 : i32
    return %arg0, %c0_i32 : i32, i32
  }
  func.func @transform_1(%arg0: i32) -> (i32, i32) {
    %c0_i32 = arith.constant 0 : i32
    %c0_i32_0 = arith.constant 0 : i32
    return %arg0, %c0_i32 : i32, i32
  }
}

</mosaic_0001>

<llo_original>
// kernel: tpu_custom_call.1
$region0: #{tpu_custom_call.1}
  #allocation0 [shape = 'u32[]', space=smem, size = 0x4, offset = 0x4, fixed_abs, tag = 'smem constant byte address 0x4 - core index']
  #allocation1 [shape = 'u32[144,128]{1,0:T(1,128)}', space=vmem, size = 0x12000, scoped, tag = 'internal scratch']
  %s0 = inlined_call_operand.hbm [shape: f32[2,1024], index: 0, kind: input, shape index: {}]
  %s1 = inlined_call_operand.hbm [shape: f32[2,1024], index: 1, kind: output, shape index: {}]
  %s2 = sld [smem:[#allocation0]]
  $region18: #{tpu_custom_call.1} parent=0
    _
  %s4 = ssub.s32 1, %s2
  %s5 = scalar_select 0, %s4, %s2
  $region1: #{tpu_custom_call.1} parent=0
    #allocation2 [shape = 'u8[8192]{0}', space=vmem, size = 0x2000, scoped, tag = 'input window, operand 0, single buffered']
    #allocation3 [shape = 's32[1]{0}', space=sflag, size = 0x4, scoped, tag = 'scoped memory for tpu_custom_call.1']
    #allocation4 [shape = 's32[1]{0}', space=sflag, size = 0x4, scoped, tag = 'scoped memory for tpu_custom_call.1']
    #allocation5 [shape = 'u8[8192]{0}', space=vmem, size = 0x2000, scoped, tag = 'output window, operand 0, single buffered']
    %6 = vsyncpa [#allocation3], 0
    %7 = vsyncpa [#allocation4], 0
    // Predicated region
    $region2: #{tpu_custom_call.1} parent=1 // pred_check
      _
    $region3: #{tpu_custom_call.1} parent=1 // pred_check_branch
      %9 = sbr.rel (0) target = $region5
    $region4: #{tpu_custom_call.1} parent=1 // pred_region
      %s11 = ssub.s32 256, 256
      %12 = vsyncadd [#allocation3], %s11
      %s14 = sshll.u32 [#allocation2], 4
      %s15 = int_to_ptr.vmem [resolvable:$true] %s14
      %17 = dma.hbm_to_vmem [thread:$0]  %s0, 256, %s15, [#allocation3]
    $region5: #{tpu_custom_call.1} parent=1 // pred_fallthru
      _
    // Predicated region
    $region6: #{tpu_custom_call.1} parent=1 // pred_check
      _
    $region7: #{tpu_custom_call.1} parent=1 // pred_check_branch
      %19 = sbr.rel (0) target = $region9
    $region8: #{tpu_custom_call.1} parent=1 // pred_region
      %20 = dma.done [#allocation3], 256
    $region9: #{tpu_custom_call.1} parent=1 // pred_fallthru
      _
    %v21 = vld [vmem:[#allocation2] sm:$0xff]
    %v22 = vld [vmem:[#allocation2 + $0x8] sm:$0xff]
    %23 = vst [vmem:[#allocation5] sm:$0xff] %v21
    %24 = vst [vmem:[#allocation5 + $0x8] sm:$0xff] %v22
    // Predicated region
    $region10: #{tpu_custom_call.1} parent=1 // pred_check
      _
    $region11: #{tpu_custom_call.1} parent=1 // pred_check_branch
      %26 = sbr.rel (0) target = $region13
    $region12: #{tpu_custom_call.1} parent=1 // pred_region
      %s28 = ssub.s32 256, 256
      %29 = vsyncadd [#allocation4], %s28
      %s31 = sshll.u32 [#allocation5], 4
      %s32 = int_to_ptr.vmem [resolvable:$true] %s31
      %34 = dma.vmem_to_hbm [thread:$0]  %s32, 256, %s1, [#allocation4]
    $region13: #{tpu_custom_call.1} parent=1 // pred_fallthru
      _
    // Predicated region
    $region14: #{tpu_custom_call.1} parent=1 // pred_check
      _
    $region15: #{tpu_custom_call.1} parent=1 // pred_check_branch
      %36 = sbr.rel (0) target = $region17
    $region16: #{tpu_custom_call.1} parent=1 // pred_region
      %37 = dma.done [#allocation4], 256
    $region17: #{tpu_custom_call.1} parent=1 // pred_fallthru
      _
    %38 = vsyncpa [#allocation3], 1
    %39 = vsyncpa [#allocation4], 1

</llo_original>
